<compile_context>
chip_gen: v6e
topology: v6e:2x2x1
jax: 0.10.0
libtpu: 0.0.40
codegen_flags: <defaults>
</compile_context>

<pallas_src>
import functools

import jax
import jax.numpy as jnp
import numpy as np
from jax import lax
from jax.experimental import pallas as pl
from jax.experimental.pallas import tpu as pltpu


# ----------------------------------------------------------------------------
# Stage 1: token max-pool + the two halves of the first Linear (tiled over N).
#   a  (N, H) = max_t(sub) @ W1_sub + b1        (b1 folded here)
#   bt (H, N) = (max_t(obj) @ W1_obj).T         (produced transposed via MXU)
# ----------------------------------------------------------------------------
def _prep_kernel(subs_ref, objs_ref, w1s_ref, w1o_ref, b1_ref, a_ref, bt_ref):
    # Max-pool in the input's native dtype (bf16 max is native on v6e/v7x);
    # only the small pooled (tn, F) tokens are cast to f32 for the MXU.
    sub_tok = jnp.max(subs_ref[...], axis=1).astype(jnp.float32)     # (tn, F)
    obj_tok = jnp.max(objs_ref[...], axis=1).astype(jnp.float32)     # (tn, F)

    a = jnp.dot(sub_tok, w1s_ref[...], preferred_element_type=jnp.float32)
    a_ref[...] = (a + b1_ref[...]).astype(a_ref.dtype)               # (tn, H)

    # bt[h, n] = sum_f W1_obj[f, h] * obj_tok[n, f]  -> (H, tn); the MXU does
    # the transposed contraction directly (no explicit transpose op).
    bt = lax.dot_general(w1o_ref[...], obj_tok,
                         dimension_numbers=(((0,), (1,)), ((), ())),
                         preferred_element_type=jnp.float32)          # (H, tn)
    bt_ref[...] = bt.astype(bt_ref.dtype)


# ----------------------------------------------------------------------------
# Stage 2: tiled pairwise stage over the (N, N) output.
# ----------------------------------------------------------------------------
def _pair_kernel(a_ref, bt_ref, w2_ref, b2_ref, out_ref, bt32_ref, *,
                 hdim, tile_i, tile_j, strip):
    ib = pl.program_id(0)
    jb = pl.program_id(1)

    # Upcast the (H, TJ) obj block once per tile so the inner loop is
    # dtype-uniform f32 (no per-iteration casts when a/bt are stored bf16).
    bt32_ref[...] = bt_ref[...].astype(jnp.float32)

    b2 = b2_ref[0]
    # Hoisted lane iota for the diagonal mask (JAX does not CSE broadcasts).
    col_ids = jb * tile_j + lax.broadcasted_iota(jnp.int32, (1, tile_j), 1)

    def strip_body(s, carry):
        r0 = pl.multiple_of(s * strip, strip)
        # (strip, H) subject slab for these output rows.
        a_strip = a_ref[pl.ds(r0, strip), :].astype(jnp.float32)

        acc = jnp.zeros((strip, tile_j), jnp.float32) + b2
        # H-unrolled accumulation: per hidden unit, a (strip, TJ) vreg slab of
        # broadcast-add + relu + w2-weighted add into the accumulator.
        # Pure VALU work, no (TI, H, TJ) temp, no cross-sublane reduction.
        for h in range(hdim):
            a_col = a_strip[:, h:h + 1]                    # (strip, 1)
            b_row = bt32_ref[h:h + 1, :]                   # (1, TJ)
            acc = acc + w2_ref[h] * jnp.maximum(a_col + b_row, 0.0)

        # Diagonal zeroing fused while `acc` is still in vregs: single store.
        row_ids = (ib * tile_i + r0
                   + lax.broadcasted_iota(jnp.int32, (strip, 1), 0))
        scores = jnp.where(row_ids == col_ids, 0.0, acc)
        out_ref[pl.ds(r0, strip), :] = scores.astype(out_ref.dtype)
        return carry

    lax.fori_loop(0, tile_i // strip, strip_body, 0)


# ----------------------------------------------------------------------------
# Generation-aware tile / VMEM budgeting.
# ----------------------------------------------------------------------------
def _vmem_capacity_bytes():
    try:
        return int(pltpu.get_tpu_info().vmem_capacity_bytes)
    except Exception:
        return 64 << 20  # conservative fallback: v7x per-TensorCore VMEM


def _divides(n, t):
    return t <= n and n % t == 0


def _pair_tile_vmem_estimate(ti, tj, hdim, inter_itemsize):
    return (2 * (ti * hdim + hdim * tj) * inter_itemsize   # a / bt (dbl buffered)
            + 2 * ti * tj * 4                              # out (dbl buffered)
            + hdim * tj * 4                                # f32 bt scratch
            + 8 * min(ti, 16) * tj * 4)                    # in-flight strip temps


def _pick_pair_tiles(n, hdim, inter_itemsize, vmem_cap):
    budget = int(0.4 * vmem_cap)
    tj_cands = [t for t in (512, 384, 256, 128) if _divides(n, t)] or [n]
    ti_cands = [t for t in (256, 128, 64, 32, 16, 8) if _divides(n, t)] or [n]

    ti, tj = ti_cands[-1], tj_cands[-1]
    found = False
    for cand_tj in tj_cands:            # prefer lane-dense (large TJ) output
        for cand_ti in ti_cands:        # then the largest row block that fits
            if _pair_tile_vmem_estimate(cand_ti, cand_tj, hdim,
                                        inter_itemsize) <= budget:
                ti, tj = cand_ti, cand_tj
                found = True
                break
        if found:
            break

    # v7x has 2 TensorCores: keep >= 2 parallel grid blocks when possible.
    if n // ti == 1 and n // tj == 1:
        for cand_ti in ti_cands:
            if cand_ti < ti:
                ti = cand_ti
                break
    return ti, tj


def _pick_prep_rows(n, t, f, itemsize, vmem_cap):
    budget = int(0.25 * vmem_cap)
    # Row blocks are multiples of 128 so the transposed (H, tn) output block
    # stays lane-dense; otherwise fall back to the whole array.
    for tn in (1024, 512, 384, 256, 128):
        if _divides(n, tn) and 4 * tn * t * f * itemsize <= budget:
            return tn
    # TODO(synk): pad N (and mask) for awkward/prime N instead of full residency.
    return n


# ----------------------------------------------------------------------------
# Wrapper.
# ----------------------------------------------------------------------------
def pair_proposal_network(encoded_subjects, encoded_objects, w1, b1, w2, b2,
                          *, interstage_dtype=jnp.float32,
                          tile_i=None, tile_j=None):
    """w1: (H, 2F), b1: (H,), w2: (1, H), b2: (1,) — same shapes as nn.Linear."""
    n, t, f = encoded_subjects.shape
    hdim = w1.shape[0]
    vmem_cap = _vmem_capacity_bytes()
    inter_isz = jnp.dtype(interstage_dtype).itemsize

    # Glue: split / transpose the first-Linear weight into the concat halves.
    # Only the small weights are cast here; the big (N, T, F) activations are
    # passed to the kernel in their native dtype (no extra HBM copy).
    w1_sub = jnp.transpose(w1[:, :f]).astype(jnp.float32)             # (F, H)
    w1_obj = jnp.transpose(w1[:, f:]).astype(jnp.float32)             # (F, H)
    b1_2d = b1.reshape(1, hdim).astype(jnp.float32)                   # (1, H)
    w2_1d = w2.reshape(hdim).astype(jnp.float32)                      # (H,)
    b2_1d = b2.reshape(1).astype(jnp.float32)                         # (1,)

    # ---- Stage 1: tiled over row blocks of N (pipelined HBM streaming) ------
    tn = _pick_prep_rows(n, t, f, encoded_subjects.dtype.itemsize, vmem_cap)
    est1 = (4 * tn * t * f * encoded_subjects.dtype.itemsize
            + 4 * 2 * tn * hdim * inter_isz
            + 2 * f * hdim * 4 + (2 << 20))
    a, bt = pl.pallas_call(
        _prep_kernel,
        out_shape=(jax.ShapeDtypeStruct((n, hdim), interstage_dtype),
                   jax.ShapeDtypeStruct((hdim, n), interstage_dtype)),
        grid=(n // tn,),
        in_specs=[
            pl.BlockSpec((tn, t, f), lambda i: (i, 0, 0)),
            pl.BlockSpec((tn, t, f), lambda i: (i, 0, 0)),
            pl.BlockSpec((f, hdim), lambda i: (0, 0)),
            pl.BlockSpec((f, hdim), lambda i: (0, 0)),
            pl.BlockSpec((1, hdim), lambda i: (0, 0)),
        ],
        out_specs=(pl.BlockSpec((tn, hdim), lambda i: (i, 0)),
                   pl.BlockSpec((hdim, tn), lambda i: (0, i))),
        compiler_params=pltpu.CompilerParams(
            dimension_semantics=("parallel",),
            vmem_limit_bytes=int(min(0.9 * vmem_cap, max(2 * est1, 16 << 20)))),
    )(encoded_subjects, encoded_objects, w1_sub, w1_obj, b1_2d)

    # ---- Stage 2: tiled pairwise kernel over the (N, N) output --------------
    if tile_i is None or tile_j is None:
        auto_ti, auto_tj = _pick_pair_tiles(n, hdim, inter_isz, vmem_cap)
        ti = tile_i if tile_i is not None else auto_ti
        tj = tile_j if tile_j is not None else auto_tj
    else:
        ti, tj = tile_i, tile_j
    assert n % ti == 0 and n % tj == 0, (n, ti, tj)

    strip = 16 if ti % 16 == 0 else (8 if ti % 8 == 0 else ti)
    est2 = _pair_tile_vmem_estimate(ti, tj, hdim, inter_isz)
    vmem_limit2 = int(min(0.9 * vmem_cap, max(2 * est2 + (4 << 20), 32 << 20)))

    # TODO(synk): for very large H, chunk the unrolled h-loop (e.g. 128 at a
    # time) inside a fori_loop to bound trace/compile size.
    kernel = functools.partial(_pair_kernel, hdim=hdim, tile_i=ti, tile_j=tj,
                               strip=strip)
    return pl.pallas_call(
        kernel,
        out_shape=jax.ShapeDtypeStruct((n, n), jnp.float32),
        grid=(n // ti, n // tj),
        in_specs=[
            pl.BlockSpec((ti, hdim), lambda i, j: (i, 0)),        # a  row block
            pl.BlockSpec((hdim, tj), lambda i, j: (0, j)),        # bt col block
            pl.BlockSpec(memory_space=pltpu.MemorySpace.SMEM),    # w2 scalars
            pl.BlockSpec(memory_space=pltpu.MemorySpace.SMEM),    # b2 scalar
        ],
        out_specs=pl.BlockSpec((ti, tj), lambda i, j: (i, j)),
        scratch_shapes=[pltpu.VMEM((hdim, tj), jnp.float32)],     # f32 bt copy
        compiler_params=pltpu.CompilerParams(
            dimension_semantics=("parallel", "parallel"),
            vmem_limit_bytes=vmem_limit2),
    )(a, bt, w2_1d, b2_1d)


# ----------------------------------------------------------------------------
# Pure-JAX reference mirroring the PyTorch double loop (vectorized).  When
# `interstage_dtype` is bf16 it applies the same inter-stage rounding the
# kernel does, so comparisons stay tight.
# ----------------------------------------------------------------------------
def pair_proposal_reference(encoded_subjects, encoded_objects, w1, b1, w2, b2,
                            interstage_dtype=jnp.float32):
    sub_tok = jnp.max(encoded_subjects.astype(jnp.float32), axis=1)
    obj_tok = jnp.max(encoded_objects.astype(jnp.float32), axis=1)
    n, f = sub_tok.shape
    a = (sub_tok @ w1[:, :f].T + b1[None, :])
    b = (obj_tok @ w1[:, f:].T)
    a = a.astype(interstage_dtype).astype(jnp.float32)
    b = b.astype(interstage_dtype).astype(jnp.float32)
    hid = jax.nn.relu(a[:, None, :] + b[None, :, :])
    scores = jnp.einsum("ijh,h->ij", hid, w2[0]) + b2[0]
    return jnp.where(jnp.eye(n, dtype=bool), 0.0, scores)


if __name__ == "__main__":
    def _run_case(n, t, f, h, input_dtype=jnp.float32,
                  interstage_dtype=jnp.float32, rtol=1e-3, atol=1e-3,
                  **tile_kwargs):
        key = jax.random.PRNGKey(0)
        k1, k2, k3, k4, k5, k6 = jax.random.split(key, 6)
        subs = jax.random.normal(k1, (n, t, f), jnp.float32).astype(input_dtype)
        objs = jax.random.normal(k2, (n, t, f), jnp.float32).astype(input_dtype)
        w1 = 0.1 * jax.random.normal(k3, (h, 2 * f), jnp.float32)
        b1 = 0.1 * jax.random.normal(k4, (h,), jnp.float32)
        w2 = 0.1 * jax.random.normal(k5, (1, h), jnp.float32)
        b2 = 0.1 * jax.random.normal(k6, (1,), jnp.float32)

        out = pair_proposal_network(subs, objs, w1, b1, w2, b2,
                                    interstage_dtype=interstage_dtype,
                                    **tile_kwargs)
        jax.block_until_ready(out)
        ref = pair_proposal_reference(subs, objs, w1, b1, w2, b2,
                                      interstage_dtype=interstage_dtype)
        np.testing.assert_allclose(np.asarray(out), np.asarray(ref),
                                   rtol=rtol, atol=atol)

    # Module-scale tiny case: single (8, 8) output tile, grid (1, 1).
    _run_case(8, 8, 32, 32)
    # Tiled case: auto-picked lane-dense output tiles with >= 2 parallel
    # blocks; H=48 exercises a non-power-of-two hidden width in the h-loop.
    _run_case(256, 8, 32, 48)
    # bf16 inputs + bf16 inter-stage a/bt (halves stage-2 streaming traffic);
    # the reference applies the same rounding, so the tolerance stays tight.
    _run_case(128, 8, 32, 32, input_dtype=jnp.bfloat16,
              interstage_dtype=jnp.bfloat16, rtol=1e-2, atol=1e-2)

    print("KERNEL_OK")
</pallas_src>

<mosaic_0001>
module attributes {stable_mosaic.version = 11 : i64} {
  func.func @_prep_kernel(%arg0: i32, %arg1: memref<8x8x32xf32, #tpu.memory_space<vmem>>, %arg2: memref<8x8x32xf32, #tpu.memory_space<vmem>>, %arg3: memref<32x32xf32, #tpu.memory_space<vmem>>, %arg4: memref<32x32xf32, #tpu.memory_space<vmem>>, %arg5: memref<1x32xf32, #tpu.memory_space<vmem>>, %arg6: memref<8x32xf32, #tpu.memory_space<vmem>>, %arg7: memref<32x8xf32, #tpu.memory_space<vmem>>) attributes {dimension_semantics = [#tpu.dimension_semantics<parallel>], iteration_bounds = array<i64: 1>, scalar_prefetch = 0 : i64, scratch_operands = 0 : i64, tpu.core_type = #tpu.core_type<tc>, window_params = [{transform_indices = @transform_0, window_bounds = array<i64: 8, 8, 32>}, {transform_indices = @transform_1, window_bounds = array<i64: 8, 8, 32>}, {pipeline_mode = #tpu.pipeline_mode<synchronous>, transform_indices = @transform_2, window_bounds = array<i64: 32, 32>}, {pipeline_mode = #tpu.pipeline_mode<synchronous>, transform_indices = @transform_3, window_bounds = array<i64: 32, 32>}, {pipeline_mode = #tpu.pipeline_mode<synchronous>, transform_indices = @transform_4, window_bounds = array<i64: 1, 32>}, {transform_indices = @transform_5, window_bounds = array<i64: 8, 32>}, {transform_indices = @transform_6, window_bounds = array<i64: 32, 8>}]} {
    %c0 = arith.constant 0 : index
    %c0_0 = arith.constant 0 : index
    %c0_1 = arith.constant 0 : index
    %0 = vector.load %arg1[%c0, %c0_0, %c0_1] : memref<8x8x32xf32, #tpu.memory_space<vmem>>, vector<8x8x32xf32>
    %cst = arith.constant dense<0xFF800000> : vector<8x32xf32>
    %1 = vector.multi_reduction <maximumf>, %0, %cst [1] : vector<8x8x32xf32> to vector<8x32xf32>
    %c0_2 = arith.constant 0 : index
    %c0_3 = arith.constant 0 : index
    %c0_4 = arith.constant 0 : index
    %2 = vector.load %arg2[%c0_2, %c0_3, %c0_4] : memref<8x8x32xf32, #tpu.memory_space<vmem>>, vector<8x8x32xf32>
    %cst_5 = arith.constant dense<0xFF800000> : vector<8x32xf32>
    %3 = vector.multi_reduction <maximumf>, %2, %cst_5 [1] : vector<8x8x32xf32> to vector<8x32xf32>
    %c0_6 = arith.constant 0 : index
    %c0_7 = arith.constant 0 : index
    %4 = vector.load %arg3[%c0_6, %c0_7] : memref<32x32xf32, #tpu.memory_space<vmem>>, vector<32x32xf32>
    %cst_8 = arith.constant dense<0.000000e+00> : vector<8x32xf32>
    %5 = tpu.matmul %1, %4, %cst_8 {dimension_numbers = #tpu.dot_dimension_numbers<[1], [0], [0], [1], [0, 0, 1, 1], [], []>} : vector<8x32xf32>, vector<32x32xf32>, vector<8x32xf32> -> vector<8x32xf32>
    %c0_9 = arith.constant 0 : index
    %c0_10 = arith.constant 0 : index
    %6 = vector.load %arg5[%c0_9, %c0_10] : memref<1x32xf32, #tpu.memory_space<vmem>>, vector<1x32xf32>
    %7 = vector.broadcast %6 : vector<1x32xf32> to vector<8x32xf32>
    %8 = arith.addf %5, %7 : vector<8x32xf32>
    %c0_11 = arith.constant 0 : index
    %c0_12 = arith.constant 0 : index
    %9 = vector.load %arg6[%c0_11, %c0_12] : memref<8x32xf32, #tpu.memory_space<vmem>>, vector<8x32xf32>
    tpu.vector_store %arg6[%c0_11, %c0_12], %8 {strides = array<i32>} : memref<8x32xf32, #tpu.memory_space<vmem>>, vector<8x32xf32>,
    %c0_13 = arith.constant 0 : index
    %c0_14 = arith.constant 0 : index
    %10 = vector.load %arg4[%c0_13, %c0_14] : memref<32x32xf32, #tpu.memory_space<vmem>>, vector<32x32xf32>
    %cst_15 = arith.constant dense<0.000000e+00> : vector<32x8xf32>
    %11 = tpu.matmul %10, %3, %cst_15 {dimension_numbers = #tpu.dot_dimension_numbers<[0], [1], [1], [0], [0, 1, 1, 0], [], []>} : vector<32x32xf32>, vector<8x32xf32>, vector<32x8xf32> -> vector<32x8xf32>
    %c0_16 = arith.constant 0 : index
    %c0_17 = arith.constant 0 : index
    %12 = vector.load %arg7[%c0_16, %c0_17] : memref<32x8xf32, #tpu.memory_space<vmem>>, vector<32x8xf32>
    tpu.vector_store %arg7[%c0_16, %c0_17], %11 {strides = array<i32>} : memref<32x8xf32, #tpu.memory_space<vmem>>, vector<32x8xf32>,
    return
  }
  func.func @transform_0(%arg0: i32) -> (i32, i32, i32) {
    %c0_i32 = arith.constant 0 : i32
    %c0_i32_0 = arith.constant 0 : i32
    %c0_i32_1 = arith.constant 0 : i32
    return %arg0, %c0_i32, %c0_i32_0 : i32, i32, i32
  }
  func.func @transform_1(%arg0: i32) -> (i32, i32, i32) {
    %c0_i32 = arith.constant 0 : i32
    %c0_i32_0 = arith.constant 0 : i32
    %c0_i32_1 = arith.constant 0 : i32
    return %arg0, %c0_i32, %c0_i32_0 : i32, i32, i32
  }
  func.func @transform_2(%arg0: i32) -> (i32, i32) {
    %c0_i32 = arith.constant 0 : i32
    %c0_i32_0 = arith.constant 0 : i32
    %c0_i32_1 = arith.constant 0 : i32
    return %c0_i32, %c0_i32_0 : i32, i32
  }
  func.func @transform_3(%arg0: i32) -> (i32, i32) {
    %c0_i32 = arith.constant 0 : i32
    %c0_i32_0 = arith.constant 0 : i32
    %c0_i32_1 = arith.constant 0 : i32
    return %c0_i32, %c0_i32_0 : i32, i32
  }
  func.func @transform_4(%arg0: i32) -> (i32, i32) {
    %c0_i32 = arith.constant 0 : i32
    %c0_i32_0 = arith.constant 0 : i32
    %c0_i32_1 = arith.constant 0 : i32
    return %c0_i32, %c0_i32_0 : i32, i32
  }
  func.func @transform_5(%arg0: i32) -> (i32, i32) {
    %c0_i32 = arith.constant 0 : i32
    %c0_i32_0 = arith.constant 0 : i32
    return %arg0, %c0_i32 : i32, i32
  }
  func.func @transform_6(%arg0: i32) -> (i32, i32) {
    %c0_i32 = arith.constant 0 : i32
    %c0_i32_0 = arith.constant 0 : i32
    return %c0_i32, %arg0 : i32, i32
  }
}

</mosaic_0001>

<llo_original>
// kernel: tpu_custom_call.1
$region0: #{tpu_custom_call.1}
  #allocation0 [shape = 'u32[]', space=smem, size = 0x4, offset = 0x4, fixed_abs, tag = 'smem constant byte address 0x4 - core index']
  #allocation1 [shape = 'u32[144,128]{1,0:T(1,128)}', space=vmem, size = 0x12000, scoped, tag = 'internal scratch']
  %s0 = inlined_call_operand.hbm [shape: f32[8,8,32], index: 0, kind: input, shape index: {}]
  %s1 = inlined_call_operand.hbm [shape: f32[8,8,32], index: 1, kind: input, shape index: {}]
  %s2 = inlined_call_operand.hbm [shape: f32[32,32], index: 2, kind: input, shape index: {}]
  %s3 = inlined_call_operand.hbm [shape: f32[32,32], index: 3, kind: input, shape index: {}]
  %s4 = inlined_call_operand.vmem [shape: f32[1,32], index: 4, kind: input, shape index: {}]
  %s5 = inlined_call_operand.hbm [shape: f32[8,32], index: 5, kind: output, shape index: {0}]
  %s6 = inlined_call_operand.vmem [shape: f32[32,8], index: 6, kind: output, shape index: {1}]
  %7 = xla_tuple %s5, %s6
  %s8 = sld [smem:[#allocation0]]
  $region54: #{tpu_custom_call.1} parent=0
    _
  %s10 = ssub.s32 1, %s8
  %s11 = scalar_select 0, %s10, %s8
  $region1: #{tpu_custom_call.1} parent=0
    #allocation2 [shape = 'u8[32768]{0}', space=vmem, size = 0x8000, scoped, tag = 'input window, operand 0, single buffered']
    #allocation3 [shape = 's32[1]{0}', space=sflag, size = 0x4, scoped, tag = 'scoped memory for tpu_custom_call.1']
    #allocation4 [shape = 's32[1]{0}', space=sflag, size = 0x4, scoped, tag = 'scoped memory for tpu_custom_call.1']
    #allocation5 [shape = 'u8[32768]{0}', space=vmem, size = 0x8000, scoped, tag = 'input window, operand 1, single buffered']
    #allocation6 [shape = 's32[1]{0}', space=sflag, size = 0x4, scoped, tag = 'scoped memory for tpu_custom_call.1']
    #allocation7 [shape = 'u8[16384]{0}', space=vmem, size = 0x4000, scoped, tag = 'input window, operand 2, single buffered']
    #allocation8 [shape = 'u8[16384]{0}', space=vmem, size = 0x4000, scoped, tag = 'input window, operand 3, single buffered']
    #allocation9 [shape = 's32[1]{0}', space=sflag, size = 0x4, scoped, tag = 'scoped memory for tpu_custom_call.1']
    #allocation10 [shape = 'u8[4096]{0}', space=vmem, size = 0x1000, scoped, tag = 'output window, operand 0, single buffered']
    %12 = vsyncpa [#allocation3], 0
    %13 = vsyncpa [#allocation6], 0
    %14 = vsyncpa [#allocation9], 0
    %15 = vsyncpa [#allocation4], 0
    // Predicated region
    $region2: #{tpu_custom_call.1} parent=1 // pred_check
      _
    $region3: #{tpu_custom_call.1} parent=1 // pred_check_branch
      %17 = sbr.rel (0) target = $region5
    $region4: #{tpu_custom_call.1} parent=1 // pred_region
      %s19 = ssub.s32 1024, 1024
      %20 = vsyncadd [#allocation3], %s19
      %s21 = sshll.u32 [#allocation2], 4
      %s22 = int_to_ptr.vmem [resolvable:$true] %s21
      %27 = dma.hbm_to_vmem [thread:$0]  %s0, 1024, %s22, [#allocation3], 128, 128, 8
    $region5: #{tpu_custom_call.1} parent=1 // pred_fallthru
      _
    // Predicated region
    $region6: #{tpu_custom_call.1} parent=1 // pred_check
      _
    $region7: #{tpu_custom_call.1} parent=1 // pred_check_branch
      %29 = sbr.rel (0) target = $region9
    $region8: #{tpu_custom_call.1} parent=1 // pred_region
      %s31 = ssub.s32 1024, 1024
      %32 = vsyncadd [#allocation6], %s31
      %s33 = sshll.u32 [#allocation5], 4
      %s34 = int_to_ptr.vmem [resolvable:$true] %s33
      %39 = dma.hbm_to_vmem [thread:$0]  %s1, 1024, %s34, [#allocation6], 128, 128, 8
    $region9: #{tpu_custom_call.1} parent=1 // pred_fallthru
      _
    // Predicated region
    $region10: #{tpu_custom_call.1} parent=1 // pred_check
      _
    $region11: #{tpu_custom_call.1} parent=1 // pred_check_branch
      %41 = sbr.rel (0) target = $region13
    $region12: #{tpu_custom_call.1} parent=1 // pred_region
      %s43 = ssub.s32 512, 512
      %44 = vsyncadd [#allocation6], %s43
      %s45 = sshll.u32 [#allocation7], 4
      %s46 = int_to_ptr.vmem [resolvable:$true] %s45
      %51 = dma.hbm_to_vmem [thread:$0]  %s2, 512, %s46, [#allocation6], 128, 128, 8
    $region13: #{tpu_custom_call.1} parent=1 // pred_fallthru
      _
    // Predicated region
    $region14: #{tpu_custom_call.1} parent=1 // pred_check
      _
    $region15: #{tpu_custom_call.1} parent=1 // pred_check_branch
      %53 = sbr.rel (0) target = $region17
    $region16: #{tpu_custom_call.1} parent=1 // pred_region
      %s55 = ssub.s32 512, 512
      %56 = vsyncadd [#allocation9], %s55
      %s57 = sshll.u32 [#allocation8], 4
      %s58 = int_to_ptr.vmem [resolvable:$true] %s57
      %63 = dma.hbm_to_vmem [thread:$0]  %s3, 512, %s58, [#allocation9], 128, 128, 8
    $region17: #{tpu_custom_call.1} parent=1 // pred_fallthru
      _
    // Predicated region
    $region18: #{tpu_custom_call.1} parent=1 // pred_check
      _
    $region19: #{tpu_custom_call.1} parent=1 // pred_check_branch
      %65 = sbr.rel (0) target = $region21
    $region20: #{tpu_custom_call.1} parent=1 // pred_region
      _
    $region21: #{tpu_custom_call.1} parent=1 // pred_fallthru
      _
    // Predicated region
    $region22: #{tpu_custom_call.1} parent=1 // pred_check
      _
    $region23: #{tpu_custom_call.1} parent=1 // pred_check_branch
      %67 = sbr.rel (0) target = $region25
    $region24: #{tpu_custom_call.1} parent=1 // pred_region
      %68 = dma.done [#allocation3], 1024
    $region25: #{tpu_custom_call.1} parent=1 // pred_fallthru
      _
    // Predicated region
    $region26: #{tpu_custom_call.1} parent=1 // pred_check
      _
    $region27: #{tpu_custom_call.1} parent=1 // pred_check_branch
      %70 = sbr.rel (0) target = $region29
    $region28: #{tpu_custom_call.1} parent=1 // pred_region
      %71 = dma.done [#allocation6], 1024
    $region29: #{tpu_custom_call.1} parent=1 // pred_fallthru
      _
    // Predicated region
    $region30: #{tpu_custom_call.1} parent=1 // pred_check
      _
    $region31: #{tpu_custom_call.1} parent=1 // pred_check_branch
      %73 = sbr.rel (0) target = $region33
    $region32: #{tpu_custom_call.1} parent=1 // pred_region
      %74 = dma.done [#allocation6], 512
    $region33: #{tpu_custom_call.1} parent=1 // pred_fallthru
      _
    // Predicated region
    $region34: #{tpu_custom_call.1} parent=1 // pred_check
      _
    $region35: #{tpu_custom_call.1} parent=1 // pred_check_branch
      %76 = sbr.rel (0) target = $region37
    $region36: #{tpu_custom_call.1} parent=1 // pred_region
      %77 = dma.done [#allocation9], 512
    $region37: #{tpu_custom_call.1} parent=1 // pred_fallthru
      _
    %v78 = vld [vmem:[#allocation2] sm:$0xff]
    %v79 = vld [vmem:[#allocation2 + $0x8] sm:$0xff]
    %v80 = vld [vmem:[#allocation2 + $0x10] sm:$0xff]
    %v81 = vld [vmem:[#allocation2 + $0x18] sm:$0xff]
    %v82 = vld [vmem:[#allocation2 + $0x20] sm:$0xff]
    %v83 = vld [vmem:[#allocation2 + $0x28] sm:$0xff]
    %v84 = vld [vmem:[#allocation2 + $0x30] sm:$0xff]
    %v85 = vld [vmem:[#allocation2 + $0x38] sm:$0xff]
    %vm86 = vcmask 261120
    %v87 = vsel %vm86, %v78, -inf
    %v88 = vrot.slane %v87, 4
    %v89 = vmax.f32 %v87, %v88
    %v90 = vrot.slane %v89, 2
    %v91 = vmax.f32 %v89, %v90
    %v92 = vrot.slane %v91, 1
    %v93 = vmax.f32 %v91, %v92
    %v94 = vsel %vm86, %v79, -inf
    %v95 = vrot.slane %v94, 4
    %v96 = vmax.f32 %v94, %v95
    %v97 = vrot.slane %v96, 2
    %v98 = vmax.f32 %v96, %v97
    %v99 = vrot.slane %v98, 1
    %v100 = vmax.f32 %v98, %v99
    %v101 = vsel %vm86, %v80, -inf
    %v102 = vrot.slane %v101, 4
    %v103 = vmax.f32 %v101, %v102
    %v104 = vrot.slane %v103, 2
    %v105 = vmax.f32 %v103, %v104
    %v106 = vrot.slane %v105, 1
    %v107 = vmax.f32 %v105, %v106
    %v108 = vsel %vm86, %v81, -inf
    %v109 = vrot.slane %v108, 4
    %v110 = vmax.f32 %v108, %v109
    %v111 = vrot.slane %v110, 2
    %v112 = vmax.f32 %v110, %v111
    %v113 = vrot.slane %v112, 1
    %v114 = vmax.f32 %v112, %v113
    %v115 = vsel %vm86, %v82, -inf
    %v116 = vrot.slane %v115, 4
    %v117 = vmax.f32 %v115, %v116
    %v118 = vrot.slane %v117, 2
    %v119 = vmax.f32 %v117, %v118
    %v120 = vrot.slane %v119, 1
    %v121 = vmax.f32 %v119, %v120
    %v122 = vsel %vm86, %v83, -inf
    %v123 = vrot.slane %v122, 4
    %v124 = vmax.f32 %v122, %v123
    %v125 = vrot.slane %v124, 2
    %v126 = vmax.f32 %v124, %v125
    %v127 = vrot.slane %v126, 1
    %v128 = vmax.f32 %v126, %v127
    %v129 = vsel %vm86, %v84, -inf
    %v130 = vrot.slane %v129, 4
    %v131 = vmax.f32 %v129, %v130
    %v132 = vrot.slane %v131, 2
    %v133 = vmax.f32 %v131, %v132
    %v134 = vrot.slane %v133, 1
    %v135 = vmax.f32 %v133, %v134
    %v136 = vsel %vm86, %v85, -inf
    %v137 = vrot.slane %v136, 4
    %v138 = vmax.f32 %v136, %v137
    %v139 = vrot.slane %v138, 2
    %v140 = vmax.f32 %v138, %v139
    %v141 = vrot.slane %v140, 1
    %v142 = vmax.f32 %v140, %v141
    %v143 = vld [vmem:[#allocation5] sm:$0xff]
    %v144 = vld [vmem:[#allocation5 + $0x8] sm:$0xff]
    %v145 = vld [vmem:[#allocation5 + $0x10] sm:$0xff]
    %v146 = vld [vmem:[#allocation5 + $0x18] sm:$0xff]
    %v147 = vld [vmem:[#allocation5 + $0x20] sm:$0xff]
    %v148 = vld [vmem:[#allocation5 + $0x28] sm:$0xff]
    %v149 = vld [vmem:[#allocation5 + $0x30] sm:$0xff]
    %v150 = vld [vmem:[#allocation5 + $0x38] sm:$0xff]
    %v151 = vsel %vm86, %v143, -inf
    %v152 = vrot.slane %v151, 4
    %v153 = vmax.f32 %v151, %v152
    %v154 = vrot.slane %v153, 2
    %v155 = vmax.f32 %v153, %v154
    %v156 = vrot.slane %v155, 1
    %v157 = vmax.f32 %v155, %v156
    %v158 = vsel %vm86, %v144, -inf
    %v159 = vrot.slane %v158, 4
    %v160 = vmax.f32 %v158, %v159
    %v161 = vrot.slane %v160, 2
    %v162 = vmax.f32 %v160, %v161
    %v163 = vrot.slane %v162, 1
    %v164 = vmax.f32 %v162, %v163
    %v165 = vsel %vm86, %v145, -inf
    %v166 = vrot.slane %v165, 4
    %v167 = vmax.f32 %v165, %v166
    %v168 = vrot.slane %v167, 2
    %v169 = vmax.f32 %v167, %v168
    %v170 = vrot.slane %v169, 1
    %v171 = vmax.f32 %v169, %v170
    %v172 = vsel %vm86, %v146, -inf
    %v173 = vrot.slane %v172, 4
    %v174 = vmax.f32 %v172, %v173
    %v175 = vrot.slane %v174, 2
    %v176 = vmax.f32 %v174, %v175
    %v177 = vrot.slane %v176, 1
    %v178 = vmax.f32 %v176, %v177
    %v179 = vsel %vm86, %v147, -inf
    %v180 = vrot.slane %v179, 4
    %v181 = vmax.f32 %v179, %v180
    %v182 = vrot.slane %v181, 2
    %v183 = vmax.f32 %v181, %v182
    %v184 = vrot.slane %v183, 1
    %v185 = vmax.f32 %v183, %v184
    %v186 = vsel %vm86, %v148, -inf
    %v187 = vrot.slane %v186, 4
    %v188 = vmax.f32 %v186, %v187
    %v189 = vrot.slane %v188, 2
    %v190 = vmax.f32 %v188, %v189
    %v191 = vrot.slane %v190, 1
    %v192 = vmax.f32 %v190, %v191
    %v193 = vsel %vm86, %v149, -inf
    %v194 = vrot.slane %v193, 4
    %v195 = vmax.f32 %v193, %v194
    %v196 = vrot.slane %v195, 2
    %v197 = vmax.f32 %v195, %v196
    %v198 = vrot.slane %v197, 1
    %v199 = vmax.f32 %v197, %v198
    %v200 = vsel %vm86, %v150, -inf
    %v201 = vrot.slane %v200, 4
    %v202 = vmax.f32 %v200, %v201
    %v203 = vrot.slane %v202, 2
    %v204 = vmax.f32 %v202, %v203
    %v205 = vrot.slane %v204, 1
    %v206 = vmax.f32 %v204, %v205
    %v207 = vld [vmem:[#allocation7] sm:$0xff]
    %v208 = vld [vmem:[#allocation7 + $0x8] sm:$0xff]
    %v209 = vld [vmem:[#allocation7 + $0x10] sm:$0xff]
    %v210 = vld [vmem:[#allocation7 + $0x18] sm:$0xff]
    %v211 = vld [vmem:[%s4] sm:$0x1]
    %v213 = vlaneseq
    %v214 = vshrl.u32 %v213, 7
    %v215 = vsub.s32 0, %v214
    %v216 = vrot.slane %v211, %v215
    %vm226 = vcmask 1041409
    %v227 = vsel %vm226, %v100, %v93
    %vm228 = vcmask 1042434
    %v229 = vsel %vm228, %v107, %v227
    %vm230 = vcmask 1043459
    %v231 = vsel %vm230, %v114, %v229
    %vm232 = vcmask 1044484
    %v233 = vsel %vm232, %v121, %v231
    %vm234 = vcmask 1045509
    %v235 = vsel %vm234, %v128, %v233
    %vm236 = vcmask 1046534
    %v237 = vsel %vm236, %v135, %v235
    %vm238 = vcmask 1047559
    %v239 = vsel %vm238, %v142, %v237
    %v240 = vsel %vm86, %v239, 0
    %242 = vmatprep.subr.mxu0 0.0
    %243 = vmatpush1.msra.mxu0 0.0
    %244 = vmatprep.subr.mxu0 0.0
    %245 = vmatpush1.msra.mxu0 0.0
    %246 = vmatprep.subr.mxu0 0.0
    %247 = vmatpush1.msra.mxu0 0.0
    %248 = vmatprep.subr.mxu0 0.0
    %249 = vmatpush1.msra.mxu0 0.0
    %250 = vmatprep.subr.mxu0 0.0
    %251 = vmatpush1.msra.mxu0 0.0
    %252 = vmatprep.subr.mxu0 0.0
    %253 = vmatpush1.msra.mxu0 0.0
    %254 = vmatprep.subr.mxu0 0.0
    %255 = vmatpush1.msra.mxu0 0.0
    %256 = vmatprep.subr.mxu0 0.0
    %257 = vmatpush1.msra.mxu0 0.0
    %258 = vmatprep.subr.mxu0 0.0
    %259 = vmatpush1.msra.mxu0 0.0
    %260 = vmatprep.subr.mxu0 0.0
    %261 = vmatpush1.msra.mxu0 0.0
    %262 = vmatprep.subr.mxu0 0.0
    %263 = vmatpush1.msra.mxu0 0.0
    %264 = vmatprep.subr.mxu0 0.0
    %265 = vmatpush1.msra.mxu0 0.0
    %266 = vmatprep.subr.mxu0 0.0
    %267 = vmatpush1.msra.mxu0 %v210
    %268 = vmatprep.subr.mxu0 0.0
    %269 = vmatpush1.msra.mxu0 %v209
    %270 = vmatprep.subr.mxu0 0.0
    %271 = vmatpush1.msra.mxu0 %v208
    %272 = vmatprep.subr.mxu0 0.0
    %273 = vmatpush1.msra.mxu0 %v207
    %274 = vmatprep.subr.mxu0 0.0
    %275 = vmatpush2.msra.mxu0 0.0
    %276 = vmatprep.subr.mxu0 0.0
    %277 = vmatpush2.msra.mxu0 0.0
    %278 = vmatprep.subr.mxu0 0.0
    %279 = vmatpush2.msra.mxu0 0.0
    %280 = vmatprep.subr.mxu0 0.0
    %281 = vmatpush2.msra.mxu0 0.0
    %282 = vmatprep.subr.mxu0 0.0
    %283 = vmatpush2.msra.mxu0 0.0
    %284 = vmatprep.subr.mxu0 0.0
    %285 = vmatpush2.msra.mxu0 0.0
    %286 = vmatprep.subr.mxu0 0.0
    %287 = vmatpush2.msra.mxu0 0.0
    %288 = vmatprep.subr.mxu0 0.0
    %289 = vmatpush2.msra.mxu0 0.0
    %290 = vmatprep.subr.mxu0 0.0
    %291 = vmatpush2.msra.mxu0 0.0
    %292 = vmatprep.subr.mxu0 0.0
    %293 = vmatpush2.msra.mxu0 0.0
    %294 = vmatprep.subr.mxu0 0.0
    %295 = vmatpush2.msra.mxu0 0.0
    %296 = vmatprep.subr.mxu0 0.0
    %297 = vmatpush2.msra.mxu0 0.0
    %298 = vmatprep.subr.mxu0 0.0
    %299 = vmatpush2.msra.mxu0 0.0
    %300 = vmatprep.subr.mxu0 0.0
    %301 = vmatpush2.msra.mxu0 0.0
    %302 = vmatprep.subr.mxu0 0.0
    %303 = vmatpush2.msra.mxu0 0.0
    %304 = vmatprep.subr.mxu0 0.0
    %305 = vmatpush2.msra.mxu0 0.0
    %306 = vmatprep.mubr.f32.mxu0 0.0
    %307 = vmatmul.mubr.f32.gmra.mxu0 %v240
    %v308 = vpop.f32.mrf.mxu0
    %v309 = vadd.f32 %v216, %v308
    %v310 = vpop.f32.mrf.mxu0
    %311 = vdwg.mxu0
    %312 = vst.msk [vmem:[#allocation10] sm:$0xff] %vm86, %v309
    %v313 = vld [vmem:[#allocation8] sm:$0xff]
    %v314 = vld [vmem:[#allocation8 + $0x8] sm:$0xff]
    %v315 = vld [vmem:[#allocation8 + $0x10] sm:$0xff]
    %v316 = vld [vmem:[#allocation8 + $0x18] sm:$0xff]
    %317 = vxpose.xlu0.b32.start [1/16] %v313, 128
    %318 = vxpose.xlu0.b32.cont [2/16] %v314, 128
    %319 = vxpose.xlu0.b32.cont [3/16] %v315, 128
    %320 = vxpose.xlu0.b32.cont [4/16] %v316, 128
    %321 = vxpose.xlu0.b32.cont [5/16] 0.0, 128
    %322 = vxpose.xlu0.b32.cont [6/16] 0.0, 128
    %323 = vxpose.xlu0.b32.cont [7/16] 0.0, 128
    %324 = vxpose.xlu0.b32.cont [8/16] 0.0, 128
    %325 = vxpose.xlu0.b32.cont [9/16] 0.0, 128
    %326 = vxpose.xlu0.b32.cont [10/16] 0.0, 128
    %327 = vxpose.xlu0.b32.cont [11/16] 0.0, 128
    %328 = vxpose.xlu0.b32.cont [12/16] 0.0, 128
    %329 = vxpose.xlu0.b32.cont [13/16] 0.0, 128
    %330 = vxpose.xlu0.b32.cont [14/16] 0.0, 128
    %331 = vxpose.xlu0.b32.cont [15/16] 0.0, 128
    %332 = vxpose.xlu0.b32.end [16/16] 0.0, 128
    %v333 = vpop.trf.xlu0
    %v334 = vpop.trf.xlu0
    %v335 = vpop.trf.xlu0
    %v336 = vpop.trf.xlu0
    %v337 = vpop.trf.xlu0
    %v338 = vpop.trf.xlu0
    %v339 = vpop.trf.xlu0
    %v340 = vpop.trf.xlu0
    %v341 = vpop.trf.xlu0
    %v342 = vpop.trf.xlu0
    %v343 = vpop.trf.xlu0
    %v344 = vpop.trf.xlu0
    %v345 = vpop.trf.xlu0
    %v346 = vpop.trf.xlu0
    %v347 = vpop.trf.xlu0
    %v348 = vpop.trf.xlu0
    %v357 = vsel %vm226, %v164, %v157
    %v358 = vsel %vm228, %v171, %v357
    %v359 = vsel %vm230, %v178, %v358
    %v360 = vsel %vm232, %v185, %v359
    %v361 = vsel %vm234, %v192, %v360
    %v362 = vsel %vm236, %v199, %v361
    %v363 = vsel %vm238, %v206, %v362
    %v365 = vsel %vm86, %v333, 0
    %v368 = vsel %vm86, %v334, 0
    %v371 = vsel %vm86, %v335, 0
    %v374 = vsel %vm86, %v336, 0
    %v376 = vsel %vm86, %v363, 0
    %378 = vmatprep.subr.mxu0 0.0
    %379 = vmatpush1.xpose.msra.mxu0 0.0
    %380 = vmatprep.subr.mxu0 0.0
    %381 = vmatpush1.xpose.msra.mxu0 0.0
    %382 = vmatprep.subr.mxu0 0.0
    %383 = vmatpush1.xpose.msra.mxu0 0.0
    %384 = vmatprep.subr.mxu0 0.0
    %385 = vmatpush1.xpose.msra.mxu0 0.0
    %386 = vmatprep.subr.mxu0 0.0
    %387 = vmatpush1.xpose.msra.mxu0 0.0
    %388 = vmatprep.subr.mxu0 0.0
    %389 = vmatpush1.xpose.msra.mxu0 0.0
    %390 = vmatprep.subr.mxu0 0.0
    %391 = vmatpush1.xpose.msra.mxu0 0.0
    %392 = vmatprep.subr.mxu0 0.0
    %393 = vmatpush1.xpose.msra.mxu0 0.0
    %394 = vmatprep.subr.mxu0 0.0
    %395 = vmatpush1.xpose.msra.mxu0 0.0
    %396 = vmatprep.subr.mxu0 0.0
    %397 = vmatpush1.xpose.msra.mxu0 0.0
    %398 = vmatprep.subr.mxu0 0.0
    %399 = vmatpush1.xpose.msra.mxu0 0.0
    %400 = vmatprep.subr.mxu0 0.0
    %401 = vmatpush1.xpose.msra.mxu0 0.0
    %402 = vmatprep.subr.mxu0 0.0
    %403 = vmatpush1.xpose.msra.mxu0 0.0
    %404 = vmatprep.subr.mxu0 0.0
    %405 = vmatpush1.xpose.msra.mxu0 0.0
    %406 = vmatprep.subr.mxu0 0.0
    %407 = vmatpush1.xpose.msra.mxu0 0.0
    %408 = vmatprep.subr.mxu0 0.0
    %409 = vmatpush1.xpose.msra.mxu0 %v376
    %410 = vmatprep.subr.mxu0 0.0
    %411 = vmatpush2.xpose.msra.mxu0 0.0
    %412 = vmatprep.subr.mxu0 0.0
    %413 = vmatpush2.xpose.msra.mxu0 0.0
    %414 = vmatprep.subr.mxu0 0.0
    %415 = vmatpush2.xpose.msra.mxu0 0.0
    %416 = vmatprep.subr.mxu0 0.0
    %417 = vmatpush2.xpose.msra.mxu0 0.0
    %418 = vmatprep.subr.mxu0 0.0
    %419 = vmatpush2.xpose.msra.mxu0 0.0
    %420 = vmatprep.subr.mxu0 0.0
    %421 = vmatpush2.xpose.msra.mxu0 0.0
    %422 = vmatprep.subr.mxu0 0.0
    %423 = vmatpush2.xpose.msra.mxu0 0.0
    %424 = vmatprep.subr.mxu0 0.0
    %425 = vmatpush2.xpose.msra.mxu0 0.0
    %426 = vmatprep.subr.mxu0 0.0
    %427 = vmatpush2.xpose.msra.mxu0 0.0
    %428 = vmatprep.subr.mxu0 0.0
    %429 = vmatpush2.xpose.msra.mxu0 0.0
    %430 = vmatprep.subr.mxu0 0.0
    %431 = vmatpush2.xpose.msra.mxu0 0.0
    %432 = vmatprep.subr.mxu0 0.0
    %433 = vmatpush2.xpose.msra.mxu0 0.0
    %434 = vmatprep.subr.mxu0 0.0
    %435 = vmatpush2.xpose.msra.mxu0 0.0
    %436 = vmatprep.subr.mxu0 0.0
    %437 = vmatpush2.xpose.msra.mxu0 0.0
    %438 = vmatprep.subr.mxu0 0.0
    %439 = vmatpush2.xpose.msra.mxu0 0.0
    %440 = vmatprep.subr.mxu0 0.0
    %441 = vmatpush2.xpose.msra.mxu0 0.0
    %442 = vmatprep.mubr.f32.mxu0 0.0
    %443 = vmatmul.mubr.f32.gmra.mxu0 %v365
    %v444 = vpop.f32.mrf.mxu0
    %v445 = vadd.f32 0.0, %v444
    %v446 = vpop.f32.mrf.mxu0
    %447 = vmatprep.mubr.f32.mxu0 0.0
    %448 = vmatmul.mubr.f32.gmra.mxu0 %v368
    %v449 = vpop.f32.mrf.mxu0
    %v450 = vadd.f32 0.0, %v449
    %v451 = vpop.f32.mrf.mxu0
    %452 = vmatprep.mubr.f32.mxu0 0.0
    %453 = vmatmul.mubr.f32.gmra.mxu0 %v371
    %v454 = vpop.f32.mrf.mxu0
    %v455 = vadd.f32 0.0, %v454
    %v456 = vpop.f32.mrf.mxu0
    %457 = vmatprep.mubr.f32.mxu0 0.0
    %458 = vmatmul.mubr.f32.gmra.mxu0 %v374
    %v459 = vpop.f32.mrf.mxu0
    %v460 = vadd.f32 0.0, %v459
    %v461 = vpop.f32.mrf.mxu0
    %462 = vdwg.mxu0
    %vm463 = vcmask 64512
    %464 = vst.msk [vmem:[%s6] sm:$0xff] %vm463, %v445
    %465 = vst.msk [vmem:[%s6 + $0x8] sm:$0xff] %vm463, %v450
    %466 = vst.msk [vmem:[%s6 + $0x10] sm:$0xff] %vm463, %v455
    %467 = vst.msk [vmem:[%s6 + $0x18] sm:$0xff] %vm463, %v460
    // Predicated region
    $region38: #{tpu_custom_call.1} parent=1 // pred_check
      _
    $region39: #{tpu_custom_call.1} parent=1 // pred_check_branch
      %469 = sbr.rel (0) target = $region41
    $region40: #{tpu_custom_call.1} parent=1 // pred_region
      %s471 = ssub.s32 128, 128
      %472 = vsyncadd [#allocation4], %s471
      %s474 = sshll.u32 [#allocation10], 4
      %s475 = int_to_ptr.vmem [resolvable:$true] %s474
      %477 = dma.vmem_to_hbm [thread:$0]  %s475, 128, %s5, [#allocation4]
    $region41: #{tpu_custom_call.1} parent=1 // pred_fallthru
      _
    // Predicated region
    $region42: #{tpu_custom_call.1} parent=1 // pred_check
      _
    $region43: #{tpu_custom_call.1} parent=1 // pred_check_branch
      %479 = sbr.rel (0) target = $region45
    $region44: #{tpu_custom_call.1} parent=1 // pred_region
      _
    $region45: #{tpu_custom_call.1} parent=1 // pred_fallthru
      _
    // Predicated region
    $region46: #{tpu_custom_call.1} parent=1 // pred_check
      _
    $region47: #{tpu_custom_call.1} parent=1 // pred_check_branch
      %481 = sbr.rel (0) target = $region49
    $region48: #{tpu_custom_call.1} parent=1 // pred_region
      %482 = dma.done [#allocation4], 128
    $region49: #{tpu_custom_call.1} parent=1 // pred_fallthru
      _
    // Predicated region
    $region50: #{tpu_custom_call.1} parent=1 // pred_check
      _
    $region51: #{tpu_custom_call.1} parent=1 // pred_check_branch
      %484 = sbr.rel (0) target = $region53
    $region52: #{tpu_custom_call.1} parent=1 // pred_region
      _
    $region53: #{tpu_custom_call.1} parent=1 // pred_fallthru
      _
    %485 = vsyncpa [#allocation3], 1
    %486 = vsyncpa [#allocation6], 1
    %487 = vsyncpa [#allocation9], 1
    %488 = vsyncpa [#allocation4], 1

</llo_original>
